<compile_context>
chip_gen: v5e
topology: v5e:2x2
jax: 0.10.0
libtpu: 0.0.40
codegen_flags: <defaults>
</compile_context>

<pallas_src>
import jax
import jax.numpy as jnp
from jax.experimental import pallas as pl
from jax.experimental.pallas import tpu as pltpu


# ---------------------------------------------------------------------------
# kernels
# ---------------------------------------------------------------------------
def _focus_transpose_kernel(x_ref, o_ref, t_ref):
    """General-dtype path.

    x_ref: (Bb, C, Hb, W)   o_ref: (Bb, 2C, Hb, W//2)   t_ref: (Bb, C, W, Hb)

    The parity split is along the lane (W) axis, so W is first moved onto the
    sublane axis with one batched XLU transpose, the two phases are picked with
    native stride-2 sublane loads, and each half is transposed back.
    """
    c = int(x_ref.shape[1])
    w = int(x_ref.shape[3])
    w2 = w // 2
    # (Bb, C, Hb, W) -> (Bb, C, W, Hb): put W on sublanes (batched XLU transpose).
    t_ref[...] = jnp.swapaxes(x_ref[...], 2, 3)
    ev = t_ref[:, :, pl.ds(0, w2, stride=2), :]        # x[..., 0::2]  (Bb, C, W2, Hb)
    od = t_ref[:, :, pl.ds(1, w2, stride=2), :]        # x[..., 1::2]  (Bb, C, W2, Hb)
    o_ref[:, 0:c, :, :] = jnp.swapaxes(ev, 2, 3)       # channels [0, C)
    o_ref[:, c:2 * c, :, :] = jnp.swapaxes(od, 2, 3)   # channels [C, 2C)


def _focus_pack16_kernel(xp_ref, o_ref):
    """bfloat16 fast path: pure DMA + VPU shifts/bitcast (no XLU, no scratch).

    xp_ref: (Bb, C, Hb, W//2) uint32, each word packs the little-endian pair
            (even, odd) of adjacent bf16 elements of the original row.
    o_ref:  (Bb, 2C, Hb, W//2) bfloat16
    """
    c = int(xp_ref.shape[1])
    packed = xp_ref[...]
    # bf16 bits placed in the high half of a u32 are exactly the f32 whose
    # bf16 truncation is that value (low mantissa bits are zero), so the
    # f32 -> bf16 cast below is bit-exact.  (NaN payloads may be canonicalised.)
    ev_bits = packed << 16                      # even element (low 16 bits) -> high half
    od_bits = (packed >> 16) << 16              # odd element already high; clear low half
    ev = jax.lax.bitcast_convert_type(ev_bits, jnp.float32).astype(o_ref.dtype)
    od = jax.lax.bitcast_convert_type(od_bits, jnp.float32).astype(o_ref.dtype)
    o_ref[:, 0:c, :, :] = ev
    o_ref[:, c:2 * c, :, :] = od


# ---------------------------------------------------------------------------
# tiling helpers
# ---------------------------------------------------------------------------
_LANE = 128


def _ceil_to(x, m):
    return ((x + m - 1) // m) * m


def _sublane_quantum(itemsize):
    # 8 sublanes of 32-bit words; narrower dtypes pack 2x / 4x along sublanes.
    return 8 * max(1, 4 // int(itemsize))


def _padded_bytes(shape, itemsize):
    """VMEM footprint of `shape` with minor dims padded to the (sublane, lane) tile."""
    *lead, sub, lane = shape
    n = 1
    for d in lead:
        n *= int(d)
    return (n * _ceil_to(int(sub), _sublane_quantum(itemsize))
            * _ceil_to(int(lane), _LANE) * int(itemsize))


def _divisors_desc(n):
    return [d for d in range(n, 0, -1) if n % d == 0]


def _vmem_limit_bytes():
    """~70% of physical VMEM (v5e/v6e 128 MiB -> ~90 MiB, v7x 64 MiB -> ~45 MiB);
    conservative 64 MiB assumption if the query is unavailable."""
    cap = 64 * 1024 * 1024
    try:
        cap = int(pltpu.get_tpu_info().vmem_capacity_bytes)
    except Exception:
        pass
    return max(16 * 1024 * 1024, min(int(cap * 0.70), 96 * 1024 * 1024))


def _pick_tiles(B, H, step_bytes, sub_q, budget_bytes):
    """Largest (block_b, block_h) whose padded per-step footprint fits the budget.

    block_h is either the full H or a multiple of the sublane quantum so the
    (8,128) rule on the second-minor block dim holds.  Prefers keeping H whole
    (long contiguous DMAs) and shrinking the batch block first.
    """
    hbs = [h for h in _divisors_desc(H) if h == H or h % sub_q == 0]
    bbs = _divisors_desc(B)
    for hb in hbs:
        for bb in bbs:
            if step_bytes(bb, hb) <= budget_bytes:
                return bb, hb
    return 1, hbs[-1]   # nothing fits the budget: smallest legal tile


# ---------------------------------------------------------------------------
# wrapper
# ---------------------------------------------------------------------------
def focus_layer(x, *, block_b=None, block_h=None):
    """Pallas TPU implementation of FocusLayer.forward.

    x: (B, C, H, W)  ->  (B, 2*C, H, W//2)
    (the module's __init__ args c1, c2, k are unused by the reference forward)
    """
    if x.ndim != 4:
        raise ValueError(f"expected 4-D NCHW input, got shape {x.shape}")
    B, C, H, W = map(int, x.shape)
    if W % 2 != 0:
        # torch.cat would also fail for odd W (the two phases differ in width).
        raise ValueError("FocusLayer requires an even last dimension")
    W2 = W // 2

    vmem_limit = _vmem_limit_bytes()
    budget = min(16 * 1024 * 1024, vmem_limit // 3)     # live buffers per grid step

    use_pack16 = x.dtype == jnp.bfloat16
    if use_pack16:
        out_isz = 2
        def step_bytes(bb, hb):                         # 2x in + 2x out (no scratch)
            return (2 * _padded_bytes((bb, C, hb, W2), 4)
                    + 2 * _padded_bytes((bb, 2 * C, hb, W2), out_isz))
        sub_q = max(_sublane_quantum(4), _sublane_quantum(out_isz))
    else:
        isz = x.dtype.itemsize
        def step_bytes(bb, hb):                         # 2x in + 1x scratch + 2x out
            return (2 * _padded_bytes((bb, C, hb, W), isz)
                    + _padded_bytes((bb, C, W, hb), isz)
                    + 2 * _padded_bytes((bb, 2 * C, hb, W2), isz))
        sub_q = _sublane_quantum(isz)

    auto_bb, auto_hb = _pick_tiles(B, H, step_bytes, sub_q, budget)
    bb = auto_bb if block_b is None else int(block_b)
    hb = auto_hb if block_h is None else int(block_h)
    if B % bb or H % hb:
        raise ValueError(f"block sizes ({bb}, {hb}) must divide (B, H)=({B}, {H})")
    if hb != H and hb % sub_q:
        raise ValueError(f"block_h={hb} must be a multiple of {sub_q} (or the full H)")

    grid = (B // bb, H // hb)
    out_shape = jax.ShapeDtypeStruct((B, 2 * C, H, W2), x.dtype)
    out_spec = pl.BlockSpec((bb, 2 * C, hb, W2), lambda i, j: (i, 0, j, 0))
    compiler_params = pltpu.CompilerParams(
        dimension_semantics=("parallel", "parallel"),
        vmem_limit_bytes=vmem_limit,
    )

    if use_pack16:
        # Free on a contiguous HBM array: reinterpret adjacent (even, odd) bf16
        # pairs as one uint32 word each.
        xp = jax.lax.bitcast_convert_type(x.reshape(B, C, H, W2, 2), jnp.uint32)
        return pl.pallas_call(
            _focus_pack16_kernel,
            out_shape=out_shape,
            grid=grid,
            in_specs=[pl.BlockSpec((bb, C, hb, W2), lambda i, j: (i, 0, j, 0))],
            out_specs=out_spec,
            compiler_params=compiler_params,
        )(xp)

    return pl.pallas_call(
        _focus_transpose_kernel,
        out_shape=out_shape,
        grid=grid,
        in_specs=[pl.BlockSpec((bb, C, hb, W), lambda i, j: (i, 0, j, 0))],
        out_specs=out_spec,
        scratch_shapes=[pltpu.VMEM((bb, C, W, hb), x.dtype)],
        compiler_params=compiler_params,
    )(x)


# ---------------------------------------------------------------------------
# main
# ---------------------------------------------------------------------------
if __name__ == "__main__":
    B, C, H, W = 2, 4, 16, 16                            # x: (batch, channels, H, W)

    key = jax.random.PRNGKey(0)
    x = jax.random.normal(key, (B, C, H, W), jnp.float32)

    # --- general (f32) path: XLU transpose + stride-2 sublane loads ----------
    out = jax.block_until_ready(focus_layer(x))
    ref = jnp.concatenate([x[..., 0::2], x[..., 1::2]], axis=1)
    assert out.shape == (B, 2 * C, H, W // 2), out.shape
    assert out.dtype == x.dtype
    assert bool(jnp.array_equal(out, ref)), "f32 kernel output mismatch vs reference"

    # --- bfloat16 fast path: u32 bitcast unpack (pure DMA + VPU) -------------
    xb = x.astype(jnp.bfloat16)
    outb = jax.block_until_ready(focus_layer(xb))
    refb = jnp.concatenate([xb[..., 0::2], xb[..., 1::2]], axis=1)
    assert outb.shape == (B, 2 * C, H, W // 2) and outb.dtype == jnp.bfloat16
    assert bool(jnp.array_equal(outb, refb)), "bf16 kernel output mismatch vs reference"

    print("KERNEL_OK")
</pallas_src>

<mosaic_0001>
module attributes {stable_mosaic.version = 11 : i64} {
  func.func @_focus_transpose_kernel(%arg0: i32, %arg1: i32, %arg2: memref<2x4x16x16xf32, #tpu.memory_space<vmem>>, %arg3: memref<2x8x16x8xf32, #tpu.memory_space<vmem>>, %arg4: memref<2x4x16x16xf32, #tpu.memory_space<vmem>>) attributes {dimension_semantics = [#tpu.dimension_semantics<parallel>, #tpu.dimension_semantics<parallel>], iteration_bounds = array<i64: 1, 1>, scalar_prefetch = 0 : i64, scratch_operands = 1 : i64, tpu.core_type = #tpu.core_type<tc>, window_params = [{transform_indices = @transform_0, window_bounds = array<i64: 2, 4, 16, 16>}, {transform_indices = @transform_1, window_bounds = array<i64: 2, 8, 16, 8>}]} {
    %c0 = arith.constant 0 : index
    %c0_0 = arith.constant 0 : index
    %c0_1 = arith.constant 0 : index
    %c0_2 = arith.constant 0 : index
    %0 = vector.load %arg2[%c0, %c0_0, %c0_1, %c0_2] : memref<2x4x16x16xf32, #tpu.memory_space<vmem>>, vector<2x4x16x16xf32>
    %1 = tpu.transpose %0, [0, 1, 3, 2] : vector<2x4x16x16xf32> -> vector<2x4x16x16xf32>
    %c0_3 = arith.constant 0 : index
    %c0_4 = arith.constant 0 : index
    %c0_5 = arith.constant 0 : index
    %c0_6 = arith.constant 0 : index
    %2 = vector.load %arg4[%c0_3, %c0_4, %c0_5, %c0_6] : memref<2x4x16x16xf32, #tpu.memory_space<vmem>>, vector<2x4x16x16xf32>
    tpu.vector_store %arg4[%c0_3, %c0_4, %c0_5, %c0_6], %1 {strides = array<i32>} : memref<2x4x16x16xf32, #tpu.memory_space<vmem>>, vector<2x4x16x16xf32>,
    %c0_7 = arith.constant 0 : index
    %c0_8 = arith.constant 0 : index
    %c0_9 = arith.constant 0 : index
    %c0_10 = arith.constant 0 : index
    %3 = tpu.strided_load %arg4[%c0_7, %c0_8, %c0_9, %c0_10] {strides = array<i32: 1, 1, 2, 1>} : memref<2x4x16x16xf32, #tpu.memory_space<vmem>>, vector<2x4x8x16xf32>
    %c0_11 = arith.constant 0 : index
    %c0_12 = arith.constant 0 : index
    %c1 = arith.constant 1 : index
    %c0_13 = arith.constant 0 : index
    %4 = tpu.strided_load %arg4[%c0_11, %c0_12, %c1, %c0_13] {strides = array<i32: 1, 1, 2, 1>} : memref<2x4x16x16xf32, #tpu.memory_space<vmem>>, vector<2x4x8x16xf32>
    %5 = tpu.transpose %3, [0, 1, 3, 2] : vector<2x4x8x16xf32> -> vector<2x4x16x8xf32>
    %c0_14 = arith.constant 0 : index
    %c0_15 = arith.constant 0 : index
    %c0_16 = arith.constant 0 : index
    %c0_17 = arith.constant 0 : index
    %6 = vector.load %arg3[%c0_14, %c0_15, %c0_16, %c0_17] : memref<2x8x16x8xf32, #tpu.memory_space<vmem>>, vector<2x4x16x8xf32>
    tpu.vector_store %arg3[%c0_14, %c0_15, %c0_16, %c0_17], %5 {strides = array<i32>} : memref<2x8x16x8xf32, #tpu.memory_space<vmem>>, vector<2x4x16x8xf32>,
    %7 = tpu.transpose %4, [0, 1, 3, 2] : vector<2x4x8x16xf32> -> vector<2x4x16x8xf32>
    %c0_18 = arith.constant 0 : index
    %c4 = arith.constant 4 : index
    %c0_19 = arith.constant 0 : index
    %c0_20 = arith.constant 0 : index
    %8 = vector.load %arg3[%c0_18, %c4, %c0_19, %c0_20] : memref<2x8x16x8xf32, #tpu.memory_space<vmem>>, vector<2x4x16x8xf32>
    tpu.vector_store %arg3[%c0_18, %c4, %c0_19, %c0_20], %7 {strides = array<i32>} : memref<2x8x16x8xf32, #tpu.memory_space<vmem>>, vector<2x4x16x8xf32>,
    return
  }
  func.func @transform_0(%arg0: i32, %arg1: i32) -> (i32, i32, i32, i32) {
    %c0_i32 = arith.constant 0 : i32
    %c0_i32_0 = arith.constant 0 : i32
    %c0_i32_1 = arith.constant 0 : i32
    return %arg0, %c0_i32, %arg1, %c0_i32_0 : i32, i32, i32, i32
  }
  func.func @transform_1(%arg0: i32, %arg1: i32) -> (i32, i32, i32, i32) {
    %c0_i32 = arith.constant 0 : i32
    %c0_i32_0 = arith.constant 0 : i32
    %c0_i32_1 = arith.constant 0 : i32
    return %arg0, %c0_i32, %arg1, %c0_i32_0 : i32, i32, i32, i32
  }
}

</mosaic_0001>

<llo_original>
// kernel: tpu_custom_call.1
$region0: #{tpu_custom_call.1}
  #allocation0 [shape = 'u32[]', space=smem, size = 0x4, offset = 0x4, fixed_abs, tag = 'smem constant byte address 0x4 - core index']
  #allocation1 [shape = 'u32[72,128]{1,0:T(1,128)}', space=vmem, size = 0x9000, scoped, tag = 'internal scratch']
  #allocation2 [shape = 'f32[2,4,16,16]{3,2,1,0:T(8,128)}', space=vmem, size = 0x10000, scoped, tag = 'scratch operand']
  %s0 = inlined_call_operand.hbm [shape: f32[2,4,16,16], index: 0, kind: input, shape index: {}]
  %s1 = inlined_call_operand.vmem [shape: f32[2,8,16,8], index: 1, kind: output, shape index: {}]
  %s2 = sld [smem:[#allocation0]]
  $region18: #{tpu_custom_call.1} parent=0
    _
  %s4 = ssub.s32 1, %s2
  %s5 = scalar_select 0, %s4, %s2
  $region1: #{tpu_custom_call.1} parent=0
    #allocation3 [shape = 'u8[65536]{0}', space=vmem, size = 0x10000, scoped, tag = 'input window, operand 0, single buffered']
    #allocation4 [shape = 's32[1]{0}', space=sflag, size = 0x4, scoped, tag = 'scoped memory for tpu_custom_call.1']
    %6 = vsyncpa [#allocation4], 0
    // Predicated region
    $region2: #{tpu_custom_call.1} parent=1 // pred_check
      _
    $region3: #{tpu_custom_call.1} parent=1 // pred_check_branch
      %8 = sbr.rel (0) target = $region5
    $region4: #{tpu_custom_call.1} parent=1 // pred_region
      %10 = vsyncadd [#allocation4], 0
      %s11 = sshll.u32 %s0, 4
      %s12 = int_to_ptr.hbm [resolvable:$true] %s11
      %s13 = sshll.u32 [#allocation3], 4
      %s14 = int_to_ptr.vmem [resolvable:$true] %s13
      %19 = dma.hbm_to_vmem [thread:$0]  %s12, 2048, %s14, [#allocation4], 128, 128, 8
    $region5: #{tpu_custom_call.1} parent=1 // pred_fallthru
      _
    // Predicated region
    $region6: #{tpu_custom_call.1} parent=1 // pred_check
      _
    $region7: #{tpu_custom_call.1} parent=1 // pred_check_branch
      %21 = sbr.rel (0) target = $region9
    $region8: #{tpu_custom_call.1} parent=1 // pred_region
      %23 = dma.done [#allocation4], 2048
    $region9: #{tpu_custom_call.1} parent=1 // pred_fallthru
      _
    %v24 = vld [vmem:[#allocation3] sm:$0xff]
    %v25 = vld [vmem:[#allocation3 + $0x8] sm:$0xff]
    %v26 = vld [vmem:[#allocation3 + $0x10] sm:$0xff]
    %v27 = vld [vmem:[#allocation3 + $0x18] sm:$0xff]
    %v28 = vld [vmem:[#allocation3 + $0x20] sm:$0xff]
    %v29 = vld [vmem:[#allocation3 + $0x28] sm:$0xff]
    %v30 = vld [vmem:[#allocation3 + $0x30] sm:$0xff]
    %v31 = vld [vmem:[#allocation3 + $0x38] sm:$0xff]
    %v32 = vld [vmem:[#allocation3 + $0x40] sm:$0xff]
    %v33 = vld [vmem:[#allocation3 + $0x48] sm:$0xff]
    %v34 = vld [vmem:[#allocation3 + $0x50] sm:$0xff]
    %v35 = vld [vmem:[#allocation3 + $0x58] sm:$0xff]
    %v36 = vld [vmem:[#allocation3 + $0x60] sm:$0xff]
    %v37 = vld [vmem:[#allocation3 + $0x68] sm:$0xff]
    %v38 = vld [vmem:[#allocation3 + $0x70] sm:$0xff]
    %v39 = vld [vmem:[#allocation3 + $0x78] sm:$0xff]
    %40 = vxpose.xlu0.b32.start [1/16] %v24, 128
    %41 = vxpose.xlu0.b32.cont [2/16] %v25, 128
    %42 = vxpose.xlu0.b32.cont [3/16] 0.0, 128
    %43 = vxpose.xlu0.b32.cont [4/16] 0.0, 128
    %44 = vxpose.xlu0.b32.cont [5/16] 0.0, 128
    %45 = vxpose.xlu0.b32.cont [6/16] 0.0, 128
    %46 = vxpose.xlu0.b32.cont [7/16] 0.0, 128
    %47 = vxpose.xlu0.b32.cont [8/16] 0.0, 128
    %48 = vxpose.xlu0.b32.cont [9/16] 0.0, 128
    %49 = vxpose.xlu0.b32.cont [10/16] 0.0, 128
    %50 = vxpose.xlu0.b32.cont [11/16] 0.0, 128
    %51 = vxpose.xlu0.b32.cont [12/16] 0.0, 128
    %52 = vxpose.xlu0.b32.cont [13/16] 0.0, 128
    %53 = vxpose.xlu0.b32.cont [14/16] 0.0, 128
    %54 = vxpose.xlu0.b32.cont [15/16] 0.0, 128
    %55 = vxpose.xlu0.b32.end [16/16] 0.0, 128
    %v56 = vpop.trf.xlu0
    %v57 = vpop.trf.xlu0
    %v58 = vpop.trf.xlu0
    %v59 = vpop.trf.xlu0
    %v60 = vpop.trf.xlu0
    %v61 = vpop.trf.xlu0
    %v62 = vpop.trf.xlu0
    %v63 = vpop.trf.xlu0
    %v64 = vpop.trf.xlu0
    %v65 = vpop.trf.xlu0
    %v66 = vpop.trf.xlu0
    %v67 = vpop.trf.xlu0
    %v68 = vpop.trf.xlu0
    %v69 = vpop.trf.xlu0
    %v70 = vpop.trf.xlu0
    %v71 = vpop.trf.xlu0
    %72 = vxpose.xlu0.b32.start [1/16] %v26, 128
    %73 = vxpose.xlu0.b32.cont [2/16] %v27, 128
    %74 = vxpose.xlu0.b32.cont [3/16] 0.0, 128
    %75 = vxpose.xlu0.b32.cont [4/16] 0.0, 128
    %76 = vxpose.xlu0.b32.cont [5/16] 0.0, 128
    %77 = vxpose.xlu0.b32.cont [6/16] 0.0, 128
    %78 = vxpose.xlu0.b32.cont [7/16] 0.0, 128
    %79 = vxpose.xlu0.b32.cont [8/16] 0.0, 128
    %80 = vxpose.xlu0.b32.cont [9/16] 0.0, 128
    %81 = vxpose.xlu0.b32.cont [10/16] 0.0, 128
    %82 = vxpose.xlu0.b32.cont [11/16] 0.0, 128
    %83 = vxpose.xlu0.b32.cont [12/16] 0.0, 128
    %84 = vxpose.xlu0.b32.cont [13/16] 0.0, 128
    %85 = vxpose.xlu0.b32.cont [14/16] 0.0, 128
    %86 = vxpose.xlu0.b32.cont [15/16] 0.0, 128
    %87 = vxpose.xlu0.b32.end [16/16] 0.0, 128
    %v88 = vpop.trf.xlu0
    %v89 = vpop.trf.xlu0
    %v90 = vpop.trf.xlu0
    %v91 = vpop.trf.xlu0
    %v92 = vpop.trf.xlu0
    %v93 = vpop.trf.xlu0
    %v94 = vpop.trf.xlu0
    %v95 = vpop.trf.xlu0
    %v96 = vpop.trf.xlu0
    %v97 = vpop.trf.xlu0
    %v98 = vpop.trf.xlu0
    %v99 = vpop.trf.xlu0
    %v100 = vpop.trf.xlu0
    %v101 = vpop.trf.xlu0
    %v102 = vpop.trf.xlu0
    %v103 = vpop.trf.xlu0
    %104 = vxpose.xlu0.b32.start [1/16] %v28, 128
    %105 = vxpose.xlu0.b32.cont [2/16] %v29, 128
    %106 = vxpose.xlu0.b32.cont [3/16] 0.0, 128
    %107 = vxpose.xlu0.b32.cont [4/16] 0.0, 128
    %108 = vxpose.xlu0.b32.cont [5/16] 0.0, 128
    %109 = vxpose.xlu0.b32.cont [6/16] 0.0, 128
    %110 = vxpose.xlu0.b32.cont [7/16] 0.0, 128
    %111 = vxpose.xlu0.b32.cont [8/16] 0.0, 128
    %112 = vxpose.xlu0.b32.cont [9/16] 0.0, 128
    %113 = vxpose.xlu0.b32.cont [10/16] 0.0, 128
    %114 = vxpose.xlu0.b32.cont [11/16] 0.0, 128
    %115 = vxpose.xlu0.b32.cont [12/16] 0.0, 128
    %116 = vxpose.xlu0.b32.cont [13/16] 0.0, 128
    %117 = vxpose.xlu0.b32.cont [14/16] 0.0, 128
    %118 = vxpose.xlu0.b32.cont [15/16] 0.0, 128
    %119 = vxpose.xlu0.b32.end [16/16] 0.0, 128
    %v120 = vpop.trf.xlu0
    %v121 = vpop.trf.xlu0
    %v122 = vpop.trf.xlu0
    %v123 = vpop.trf.xlu0
    %v124 = vpop.trf.xlu0
    %v125 = vpop.trf.xlu0
    %v126 = vpop.trf.xlu0
    %v127 = vpop.trf.xlu0
    %v128 = vpop.trf.xlu0
    %v129 = vpop.trf.xlu0
    %v130 = vpop.trf.xlu0
    %v131 = vpop.trf.xlu0
    %v132 = vpop.trf.xlu0
    %v133 = vpop.trf.xlu0
    %v134 = vpop.trf.xlu0
    %v135 = vpop.trf.xlu0
    %136 = vxpose.xlu0.b32.start [1/16] %v30, 128
    %137 = vxpose.xlu0.b32.cont [2/16] %v31, 128
    %138 = vxpose.xlu0.b32.cont [3/16] 0.0, 128
    %139 = vxpose.xlu0.b32.cont [4/16] 0.0, 128
    %140 = vxpose.xlu0.b32.cont [5/16] 0.0, 128
    %141 = vxpose.xlu0.b32.cont [6/16] 0.0, 128
    %142 = vxpose.xlu0.b32.cont [7/16] 0.0, 128
    %143 = vxpose.xlu0.b32.cont [8/16] 0.0, 128
    %144 = vxpose.xlu0.b32.cont [9/16] 0.0, 128
    %145 = vxpose.xlu0.b32.cont [10/16] 0.0, 128
    %146 = vxpose.xlu0.b32.cont [11/16] 0.0, 128
    %147 = vxpose.xlu0.b32.cont [12/16] 0.0, 128
    %148 = vxpose.xlu0.b32.cont [13/16] 0.0, 128
    %149 = vxpose.xlu0.b32.cont [14/16] 0.0, 128
    %150 = vxpose.xlu0.b32.cont [15/16] 0.0, 128
    %151 = vxpose.xlu0.b32.end [16/16] 0.0, 128
    %v152 = vpop.trf.xlu0
    %v153 = vpop.trf.xlu0
    %v154 = vpop.trf.xlu0
    %v155 = vpop.trf.xlu0
    %v156 = vpop.trf.xlu0
    %v157 = vpop.trf.xlu0
    %v158 = vpop.trf.xlu0
    %v159 = vpop.trf.xlu0
    %v160 = vpop.trf.xlu0
    %v161 = vpop.trf.xlu0
    %v162 = vpop.trf.xlu0
    %v163 = vpop.trf.xlu0
    %v164 = vpop.trf.xlu0
    %v165 = vpop.trf.xlu0
    %v166 = vpop.trf.xlu0
    %v167 = vpop.trf.xlu0
    %168 = vxpose.xlu0.b32.start [1/16] %v32, 128
    %169 = vxpose.xlu0.b32.cont [2/16] %v33, 128
    %170 = vxpose.xlu0.b32.cont [3/16] 0.0, 128
    %171 = vxpose.xlu0.b32.cont [4/16] 0.0, 128
    %172 = vxpose.xlu0.b32.cont [5/16] 0.0, 128
    %173 = vxpose.xlu0.b32.cont [6/16] 0.0, 128
    %174 = vxpose.xlu0.b32.cont [7/16] 0.0, 128
    %175 = vxpose.xlu0.b32.cont [8/16] 0.0, 128
    %176 = vxpose.xlu0.b32.cont [9/16] 0.0, 128
    %177 = vxpose.xlu0.b32.cont [10/16] 0.0, 128
    %178 = vxpose.xlu0.b32.cont [11/16] 0.0, 128
    %179 = vxpose.xlu0.b32.cont [12/16] 0.0, 128
    %180 = vxpose.xlu0.b32.cont [13/16] 0.0, 128
    %181 = vxpose.xlu0.b32.cont [14/16] 0.0, 128
    %182 = vxpose.xlu0.b32.cont [15/16] 0.0, 128
    %183 = vxpose.xlu0.b32.end [16/16] 0.0, 128
    %v184 = vpop.trf.xlu0
    %v185 = vpop.trf.xlu0
    %v186 = vpop.trf.xlu0
    %v187 = vpop.trf.xlu0
    %v188 = vpop.trf.xlu0
    %v189 = vpop.trf.xlu0
    %v190 = vpop.trf.xlu0
    %v191 = vpop.trf.xlu0
    %v192 = vpop.trf.xlu0
    %v193 = vpop.trf.xlu0
    %v194 = vpop.trf.xlu0
    %v195 = vpop.trf.xlu0
    %v196 = vpop.trf.xlu0
    %v197 = vpop.trf.xlu0
    %v198 = vpop.trf.xlu0
    %v199 = vpop.trf.xlu0
    %200 = vxpose.xlu0.b32.start [1/16] %v34, 128
    %201 = vxpose.xlu0.b32.cont [2/16] %v35, 128
    %202 = vxpose.xlu0.b32.cont [3/16] 0.0, 128
    %203 = vxpose.xlu0.b32.cont [4/16] 0.0, 128
    %204 = vxpose.xlu0.b32.cont [5/16] 0.0, 128
    %205 = vxpose.xlu0.b32.cont [6/16] 0.0, 128
    %206 = vxpose.xlu0.b32.cont [7/16] 0.0, 128
    %207 = vxpose.xlu0.b32.cont [8/16] 0.0, 128
    %208 = vxpose.xlu0.b32.cont [9/16] 0.0, 128
    %209 = vxpose.xlu0.b32.cont [10/16] 0.0, 128
    %210 = vxpose.xlu0.b32.cont [11/16] 0.0, 128
    %211 = vxpose.xlu0.b32.cont [12/16] 0.0, 128
    %212 = vxpose.xlu0.b32.cont [13/16] 0.0, 128
    %213 = vxpose.xlu0.b32.cont [14/16] 0.0, 128
    %214 = vxpose.xlu0.b32.cont [15/16] 0.0, 128
    %215 = vxpose.xlu0.b32.end [16/16] 0.0, 128
    %v216 = vpop.trf.xlu0
    %v217 = vpop.trf.xlu0
    %v218 = vpop.trf.xlu0
    %v219 = vpop.trf.xlu0
    %v220 = vpop.trf.xlu0
    %v221 = vpop.trf.xlu0
    %v222 = vpop.trf.xlu0
    %v223 = vpop.trf.xlu0
    %v224 = vpop.trf.xlu0
    %v225 = vpop.trf.xlu0
    %v226 = vpop.trf.xlu0
    %v227 = vpop.trf.xlu0
    %v228 = vpop.trf.xlu0
    %v229 = vpop.trf.xlu0
    %v230 = vpop.trf.xlu0
    %v231 = vpop.trf.xlu0
    %232 = vxpose.xlu0.b32.start [1/16] %v36, 128
    %233 = vxpose.xlu0.b32.cont [2/16] %v37, 128
    %234 = vxpose.xlu0.b32.cont [3/16] 0.0, 128
    %235 = vxpose.xlu0.b32.cont [4/16] 0.0, 128
    %236 = vxpose.xlu0.b32.cont [5/16] 0.0, 128
    %237 = vxpose.xlu0.b32.cont [6/16] 0.0, 128
    %238 = vxpose.xlu0.b32.cont [7/16] 0.0, 128
    %239 = vxpose.xlu0.b32.cont [8/16] 0.0, 128
    %240 = vxpose.xlu0.b32.cont [9/16] 0.0, 128
    %241 = vxpose.xlu0.b32.cont [10/16] 0.0, 128
    %242 = vxpose.xlu0.b32.cont [11/16] 0.0, 128
    %243 = vxpose.xlu0.b32.cont [12/16] 0.0, 128
    %244 = vxpose.xlu0.b32.cont [13/16] 0.0, 128
    %245 = vxpose.xlu0.b32.cont [14/16] 0.0, 128
    %246 = vxpose.xlu0.b32.cont [15/16] 0.0, 128
    %247 = vxpose.xlu0.b32.end [16/16] 0.0, 128
    %v248 = vpop.trf.xlu0
    %v249 = vpop.trf.xlu0
    %v250 = vpop.trf.xlu0
    %v251 = vpop.trf.xlu0
    %v252 = vpop.trf.xlu0
    %v253 = vpop.trf.xlu0
    %v254 = vpop.trf.xlu0
    %v255 = vpop.trf.xlu0
    %v256 = vpop.trf.xlu0
    %v257 = vpop.trf.xlu0
    %v258 = vpop.trf.xlu0
    %v259 = vpop.trf.xlu0
    %v260 = vpop.trf.xlu0
    %v261 = vpop.trf.xlu0
    %v262 = vpop.trf.xlu0
    %v263 = vpop.trf.xlu0
    %264 = vxpose.xlu0.b32.start [1/16] %v38, 128
    %265 = vxpose.xlu0.b32.cont [2/16] %v39, 128
    %266 = vxpose.xlu0.b32.cont [3/16] 0.0, 128
    %267 = vxpose.xlu0.b32.cont [4/16] 0.0, 128
    %268 = vxpose.xlu0.b32.cont [5/16] 0.0, 128
    %269 = vxpose.xlu0.b32.cont [6/16] 0.0, 128
    %270 = vxpose.xlu0.b32.cont [7/16] 0.0, 128
    %271 = vxpose.xlu0.b32.cont [8/16] 0.0, 128
    %272 = vxpose.xlu0.b32.cont [9/16] 0.0, 128
    %273 = vxpose.xlu0.b32.cont [10/16] 0.0, 128
    %274 = vxpose.xlu0.b32.cont [11/16] 0.0, 128
    %275 = vxpose.xlu0.b32.cont [12/16] 0.0, 128
    %276 = vxpose.xlu0.b32.cont [13/16] 0.0, 128
    %277 = vxpose.xlu0.b32.cont [14/16] 0.0, 128
    %278 = vxpose.xlu0.b32.cont [15/16] 0.0, 128
    %279 = vxpose.xlu0.b32.end [16/16] 0.0, 128
    %v280 = vpop.trf.xlu0
    %v281 = vpop.trf.xlu0
    %v282 = vpop.trf.xlu0
    %v283 = vpop.trf.xlu0
    %v284 = vpop.trf.xlu0
    %v285 = vpop.trf.xlu0
    %v286 = vpop.trf.xlu0
    %v287 = vpop.trf.xlu0
    %v288 = vpop.trf.xlu0
    %v289 = vpop.trf.xlu0
    %v290 = vpop.trf.xlu0
    %v291 = vpop.trf.xlu0
    %v292 = vpop.trf.xlu0
    %v293 = vpop.trf.xlu0
    %v294 = vpop.trf.xlu0
    %v295 = vpop.trf.xlu0
    %vm296 = vcmask 130048
    %297 = vst.msk [vmem:[#allocation2] sm:$0xff] %vm296, %v56
    %298 = vst.msk [vmem:[#allocation2 + $0x8] sm:$0xff] %vm296, %v57
    %299 = vst.msk [vmem:[#allocation2 + $0x10] sm:$0xff] %vm296, %v88
    %300 = vst.msk [vmem:[#allocation2 + $0x18] sm:$0xff] %vm296, %v89
    %301 = vst.msk [vmem:[#allocation2 + $0x20] sm:$0xff] %vm296, %v120
    %302 = vst.msk [vmem:[#allocation2 + $0x28] sm:$0xff] %vm296, %v121
    %303 = vst.msk [vmem:[#allocation2 + $0x30] sm:$0xff] %vm296, %v152
    %304 = vst.msk [vmem:[#allocation2 + $0x38] sm:$0xff] %vm296, %v153
    %305 = vst.msk [vmem:[#allocation2 + $0x40] sm:$0xff] %vm296, %v184
    %306 = vst.msk [vmem:[#allocation2 + $0x48] sm:$0xff] %vm296, %v185
    %307 = vst.msk [vmem:[#allocation2 + $0x50] sm:$0xff] %vm296, %v216
    %308 = vst.msk [vmem:[#allocation2 + $0x58] sm:$0xff] %vm296, %v217
    %309 = vst.msk [vmem:[#allocation2 + $0x60] sm:$0xff] %vm296, %v248
    %310 = vst.msk [vmem:[#allocation2 + $0x68] sm:$0xff] %vm296, %v249
    %311 = vst.msk [vmem:[#allocation2 + $0x70] sm:$0xff] %vm296, %v280
    %312 = vst.msk [vmem:[#allocation2 + $0x78] sm:$0xff] %vm296, %v281
    %v313 = vld [vmem:[#allocation2] ss:$2 sm:$0xff]
    %s314 = scalar_lea.vmem [#allocation2], 16
    %v315 = vld [vmem:[%s314] ss:$2 sm:$0xff]
    %s316 = scalar_lea.vmem [#allocation2], 32
    %v317 = vld [vmem:[%s316] ss:$2 sm:$0xff]
    %s318 = scalar_lea.vmem [#allocation2], 48
    %v319 = vld [vmem:[%s318] ss:$2 sm:$0xff]
    %s320 = scalar_lea.vmem [#allocation2], 64
    %v321 = vld [vmem:[%s320] ss:$2 sm:$0xff]
    %s322 = scalar_lea.vmem [#allocation2], 80
    %v323 = vld [vmem:[%s322] ss:$2 sm:$0xff]
    %s324 = scalar_lea.vmem [#allocation2], 96
    %v325 = vld [vmem:[%s324] ss:$2 sm:$0xff]
    %s326 = scalar_lea.vmem [#allocation2], 112
    %v327 = vld [vmem:[%s326] ss:$2 sm:$0xff]
    %s328 = scalar_lea.vmem [#allocation2], 1
    %v329 = vld [vmem:[%s328] ss:$2 sm:$0xff]
    %s330 = scalar_lea.vmem [#allocation2], 17
    %v331 = vld [vmem:[%s330] ss:$2 sm:$0xff]
    %s332 = scalar_lea.vmem [#allocation2], 33
    %v333 = vld [vmem:[%s332] ss:$2 sm:$0xff]
    %s334 = scalar_lea.vmem [#allocation2], 49
    %v335 = vld [vmem:[%s334] ss:$2 sm:$0xff]
    %s336 = scalar_lea.vmem [#allocation2], 65
    %v337 = vld [vmem:[%s336] ss:$2 sm:$0xff]
    %s338 = scalar_lea.vmem [#allocation2], 81
    %v339 = vld [vmem:[%s338] ss:$2 sm:$0xff]
    %s340 = scalar_lea.vmem [#allocation2], 97
    %v341 = vld [vmem:[%s340] ss:$2 sm:$0xff]
    %s342 = scalar_lea.vmem [#allocation2], 113
    %v343 = vld [vmem:[%s342] ss:$2 sm:$0xff]
    %344 = vxpose.xlu0.b32.start [1/16] %v313, 128
    %345 = vxpose.xlu0.b32.cont [2/16] 0.0, 128
    %346 = vxpose.xlu0.b32.cont [3/16] 0.0, 128
    %347 = vxpose.xlu0.b32.cont [4/16] 0.0, 128
    %348 = vxpose.xlu0.b32.cont [5/16] 0.0, 128
    %349 = vxpose.xlu0.b32.cont [6/16] 0.0, 128
    %350 = vxpose.xlu0.b32.cont [7/16] 0.0, 128
    %351 = vxpose.xlu0.b32.cont [8/16] 0.0, 128
    %352 = vxpose.xlu0.b32.cont [9/16] 0.0, 128
    %353 = vxpose.xlu0.b32.cont [10/16] 0.0, 128
    %354 = vxpose.xlu0.b32.cont [11/16] 0.0, 128
    %355 = vxpose.xlu0.b32.cont [12/16] 0.0, 128
    %356 = vxpose.xlu0.b32.cont [13/16] 0.0, 128
    %357 = vxpose.xlu0.b32.cont [14/16] 0.0, 128
    %358 = vxpose.xlu0.b32.cont [15/16] 0.0, 128
    %359 = vxpose.xlu0.b32.end [16/16] 0.0, 128
    %v360 = vpop.trf.xlu0
    %v361 = vpop.trf.xlu0
    %v362 = vpop.trf.xlu0
    %v363 = vpop.trf.xlu0
    %v364 = vpop.trf.xlu0
    %v365 = vpop.trf.xlu0
    %v366 = vpop.trf.xlu0
    %v367 = vpop.trf.xlu0
    %v368 = vpop.trf.xlu0
    %v369 = vpop.trf.xlu0
    %v370 = vpop.trf.xlu0
    %v371 = vpop.trf.xlu0
    %v372 = vpop.trf.xlu0
    %v373 = vpop.trf.xlu0
    %v374 = vpop.trf.xlu0
    %v375 = vpop.trf.xlu0
    %376 = vxpose.xlu0.b32.start [1/16] %v315, 128
    %377 = vxpose.xlu0.b32.cont [2/16] 0.0, 128
    %378 = vxpose.xlu0.b32.cont [3/16] 0.0, 128
    %379 = vxpose.xlu0.b32.cont [4/16] 0.0, 128
    %380 = vxpose.xlu0.b32.cont [5/16] 0.0, 128
    %381 = vxpose.xlu0.b32.cont [6/16] 0.0, 128
    %382 = vxpose.xlu0.b32.cont [7/16] 0.0, 128
    %383 = vxpose.xlu0.b32.cont [8/16] 0.0, 128
    %384 = vxpose.xlu0.b32.cont [9/16] 0.0, 128
    %385 = vxpose.xlu0.b32.cont [10/16] 0.0, 128
    %386 = vxpose.xlu0.b32.cont [11/16] 0.0, 128
    %387 = vxpose.xlu0.b32.cont [12/16] 0.0, 128
    %388 = vxpose.xlu0.b32.cont [13/16] 0.0, 128
    %389 = vxpose.xlu0.b32.cont [14/16] 0.0, 128
    %390 = vxpose.xlu0.b32.cont [15/16] 0.0, 128
    %391 = vxpose.xlu0.b32.end [16/16] 0.0, 128
    %v392 = vpop.trf.xlu0
    %v393 = vpop.trf.xlu0
    %v394 = vpop.trf.xlu0
    %v395 = vpop.trf.xlu0
    %v396 = vpop.trf.xlu0
    %v397 = vpop.trf.xlu0
    %v398 = vpop.trf.xlu0
    %v399 = vpop.trf.xlu0
    %v400 = vpop.trf.xlu0
    %v401 = vpop.trf.xlu0
    %v402 = vpop.trf.xlu0
    %v403 = vpop.trf.xlu0
    %v404 = vpop.trf.xlu0
    %v405 = vpop.trf.xlu0
    %v406 = vpop.trf.xlu0
    %v407 = vpop.trf.xlu0
    %408 = vxpose.xlu0.b32.start [1/16] %v317, 128
    %409 = vxpose.xlu0.b32.cont [2/16] 0.0, 128
    %410 = vxpose.xlu0.b32.cont [3/16] 0.0, 128
    %411 = vxpose.xlu0.b32.cont [4/16] 0.0, 128
    %412 = vxpose.xlu0.b32.cont [5/16] 0.0, 128
    %413 = vxpose.xlu0.b32.cont [6/16] 0.0, 128
    %414 = vxpose.xlu0.b32.cont [7/16] 0.0, 128
    %415 = vxpose.xlu0.b32.cont [8/16] 0.0, 128
    %416 = vxpose.xlu0.b32.cont [9/16] 0.0, 128
    %417 = vxpose.xlu0.b32.cont [10/16] 0.0, 128
    %418 = vxpose.xlu0.b32.cont [11/16] 0.0, 128
    %419 = vxpose.xlu0.b32.cont [12/16] 0.0, 128
    %420 = vxpose.xlu0.b32.cont [13/16] 0.0, 128
    %421 = vxpose.xlu0.b32.cont [14/16] 0.0, 128
    %422 = vxpose.xlu0.b32.cont [15/16] 0.0, 128
    %423 = vxpose.xlu0.b32.end [16/16] 0.0, 128
    %v424 = vpop.trf.xlu0
    %v425 = vpop.trf.xlu0
    %v426 = vpop.trf.xlu0
    %v427 = vpop.trf.xlu0
    %v428 = vpop.trf.xlu0
    %v429 = vpop.trf.xlu0
    %v430 = vpop.trf.xlu0
    %v431 = vpop.trf.xlu0
    %v432 = vpop.trf.xlu0
    %v433 = vpop.trf.xlu0
    %v434 = vpop.trf.xlu0
    %v435 = vpop.trf.xlu0
    %v436 = vpop.trf.xlu0
    %v437 = vpop.trf.xlu0
    %v438 = vpop.trf.xlu0
    %v439 = vpop.trf.xlu0
    %440 = vxpose.xlu0.b32.start [1/16] %v319, 128
    %441 = vxpose.xlu0.b32.cont [2/16] 0.0, 128
    %442 = vxpose.xlu0.b32.cont [3/16] 0.0, 128
    %443 = vxpose.xlu0.b32.cont [4/16] 0.0, 128
    %444 = vxpose.xlu0.b32.cont [5/16] 0.0, 128
    %445 = vxpose.xlu0.b32.cont [6/16] 0.0, 128
    %446 = vxpose.xlu0.b32.cont [7/16] 0.0, 128
    %447 = vxpose.xlu0.b32.cont [8/16] 0.0, 128
    %448 = vxpose.xlu0.b32.cont [9/16] 0.0, 128
    %449 = vxpose.xlu0.b32.cont [10/16] 0.0, 128
    %450 = vxpose.xlu0.b32.cont [11/16] 0.0, 128
    %451 = vxpose.xlu0.b32.cont [12/16] 0.0, 128
    %452 = vxpose.xlu0.b32.cont [13/16] 0.0, 128
    %453 = vxpose.xlu0.b32.cont [14/16] 0.0, 128
    %454 = vxpose.xlu0.b32.cont [15/16] 0.0, 128
    %455 = vxpose.xlu0.b32.end [16/16] 0.0, 128
    %v456 = vpop.trf.xlu0
    %v457 = vpop.trf.xlu0
    %v458 = vpop.trf.xlu0
    %v459 = vpop.trf.xlu0
    %v460 = vpop.trf.xlu0
    %v461 = vpop.trf.xlu0
    %v462 = vpop.trf.xlu0
    %v463 = vpop.trf.xlu0
    %v464 = vpop.trf.xlu0
    %v465 = vpop.trf.xlu0
    %v466 = vpop.trf.xlu0
    %v467 = vpop.trf.xlu0
    %v468 = vpop.trf.xlu0
    %v469 = vpop.trf.xlu0
    %v470 = vpop.trf.xlu0
    %v471 = vpop.trf.xlu0
    %472 = vxpose.xlu0.b32.start [1/16] %v321, 128
    %473 = vxpose.xlu0.b32.cont [2/16] 0.0, 128
    %474 = vxpose.xlu0.b32.cont [3/16] 0.0, 128
    %475 = vxpose.xlu0.b32.cont [4/16] 0.0, 128
    %476 = vxpose.xlu0.b32.cont [5/16] 0.0, 128
    %477 = vxpose.xlu0.b32.cont [6/16] 0.0, 128
    %478 = vxpose.xlu0.b32.cont [7/16] 0.0, 128
    %479 = vxpose.xlu0.b32.cont [8/16] 0.0, 128
    %480 = vxpose.xlu0.b32.cont [9/16] 0.0, 128
    %481 = vxpose.xlu0.b32.cont [10/16] 0.0, 128
    %482 = vxpose.xlu0.b32.cont [11/16] 0.0, 128
    %483 = vxpose.xlu0.b32.cont [12/16] 0.0, 128
    %484 = vxpose.xlu0.b32.cont [13/16] 0.0, 128
    %485 = vxpose.xlu0.b32.cont [14/16] 0.0, 128
    %486 = vxpose.xlu0.b32.cont [15/16] 0.0, 128
    %487 = vxpose.xlu0.b32.end [16/16] 0.0, 128
    %v488 = vpop.trf.xlu0
    %v489 = vpop.trf.xlu0
    %v490 = vpop.trf.xlu0
    %v491 = vpop.trf.xlu0
    %v492 = vpop.trf.xlu0
    %v493 = vpop.trf.xlu0
    %v494 = vpop.trf.xlu0
    %v495 = vpop.trf.xlu0
    %v496 = vpop.trf.xlu0
    %v497 = vpop.trf.xlu0
    %v498 = vpop.trf.xlu0
    %v499 = vpop.trf.xlu0
    %v500 = vpop.trf.xlu0
    %v501 = vpop.trf.xlu0
    %v502 = vpop.trf.xlu0
    %v503 = vpop.trf.xlu0
    %504 = vxpose.xlu0.b32.start [1/16] %v323, 128
    %505 = vxpose.xlu0.b32.cont [2/16] 0.0, 128
    %506 = vxpose.xlu0.b32.cont [3/16] 0.0, 128
    %507 = vxpose.xlu0.b32.cont [4/16] 0.0, 128
    %508 = vxpose.xlu0.b32.cont [5/16] 0.0, 128
    %509 = vxpose.xlu0.b32.cont [6/16] 0.0, 128
    %510 = vxpose.xlu0.b32.cont [7/16] 0.0, 128
    %511 = vxpose.xlu0.b32.cont [8/16] 0.0, 128
    %512 = vxpose.xlu0.b32.cont [9/16] 0.0, 128
    %513 = vxpose.xlu0.b32.cont [10/16] 0.0, 128
    %514 = vxpose.xlu0.b32.cont [11/16] 0.0, 128
    %515 = vxpose.xlu0.b32.cont [12/16] 0.0, 128
    %516 = vxpose.xlu0.b32.cont [13/16] 0.0, 128
    %517 = vxpose.xlu0.b32.cont [14/16] 0.0, 128
    %518 = vxpose.xlu0.b32.cont [15/16] 0.0, 128
    %519 = vxpose.xlu0.b32.end [16/16] 0.0, 128
    %v520 = vpop.trf.xlu0
    %v521 = vpop.trf.xlu0
    %v522 = vpop.trf.xlu0
    %v523 = vpop.trf.xlu0
    %v524 = vpop.trf.xlu0
    %v525 = vpop.trf.xlu0
    %v526 = vpop.trf.xlu0
    %v527 = vpop.trf.xlu0
    %v528 = vpop.trf.xlu0
    %v529 = vpop.trf.xlu0
    %v530 = vpop.trf.xlu0
    %v531 = vpop.trf.xlu0
    %v532 = vpop.trf.xlu0
    %v533 = vpop.trf.xlu0
    %v534 = vpop.trf.xlu0
    %v535 = vpop.trf.xlu0
    %536 = vxpose.xlu0.b32.start [1/16] %v325, 128
    %537 = vxpose.xlu0.b32.cont [2/16] 0.0, 128
    %538 = vxpose.xlu0.b32.cont [3/16] 0.0, 128
    %539 = vxpose.xlu0.b32.cont [4/16] 0.0, 128
    %540 = vxpose.xlu0.b32.cont [5/16] 0.0, 128
    %541 = vxpose.xlu0.b32.cont [6/16] 0.0, 128
    %542 = vxpose.xlu0.b32.cont [7/16] 0.0, 128
    %543 = vxpose.xlu0.b32.cont [8/16] 0.0, 128
    %544 = vxpose.xlu0.b32.cont [9/16] 0.0, 128
    %545 = vxpose.xlu0.b32.cont [10/16] 0.0, 128
    %546 = vxpose.xlu0.b32.cont [11/16] 0.0, 128
    %547 = vxpose.xlu0.b32.cont [12/16] 0.0, 128
    %548 = vxpose.xlu0.b32.cont [13/16] 0.0, 128
    %549 = vxpose.xlu0.b32.cont [14/16] 0.0, 128
    %550 = vxpose.xlu0.b32.cont [15/16] 0.0, 128
    %551 = vxpose.xlu0.b32.end [16/16] 0.0, 128
    %v552 = vpop.trf.xlu0
    %v553 = vpop.trf.xlu0
    %v554 = vpop.trf.xlu0
    %v555 = vpop.trf.xlu0
    %v556 = vpop.trf.xlu0
    %v557 = vpop.trf.xlu0
    %v558 = vpop.trf.xlu0
    %v559 = vpop.trf.xlu0
    %v560 = vpop.trf.xlu0
    %v561 = vpop.trf.xlu0
    %v562 = vpop.trf.xlu0
    %v563 = vpop.trf.xlu0
    %v564 = vpop.trf.xlu0
    %v565 = vpop.trf.xlu0
    %v566 = vpop.trf.xlu0
    %v567 = vpop.trf.xlu0
    %568 = vxpose.xlu0.b32.start [1/16] %v327, 128
    %569 = vxpose.xlu0.b32.cont [2/16] 0.0, 128
    %570 = vxpose.xlu0.b32.cont [3/16] 0.0, 128
    %571 = vxpose.xlu0.b32.cont [4/16] 0.0, 128
    %572 = vxpose.xlu0.b32.cont [5/16] 0.0, 128
    %573 = vxpose.xlu0.b32.cont [6/16] 0.0, 128
    %574 = vxpose.xlu0.b32.cont [7/16] 0.0, 128
    %575 = vxpose.xlu0.b32.cont [8/16] 0.0, 128
    %576 = vxpose.xlu0.b32.cont [9/16] 0.0, 128
    %577 = vxpose.xlu0.b32.cont [10/16] 0.0, 128
    %578 = vxpose.xlu0.b32.cont [11/16] 0.0, 128
    %579 = vxpose.xlu0.b32.cont [12/16] 0.0, 128
    %580 = vxpose.xlu0.b32.cont [13/16] 0.0, 128
    %581 = vxpose.xlu0.b32.cont [14/16] 0.0, 128
    %582 = vxpose.xlu0.b32.cont [15/16] 0.0, 128
    %583 = vxpose.xlu0.b32.end [16/16] 0.0, 128
    %v584 = vpop.trf.xlu0
    %v585 = vpop.trf.xlu0
    %v586 = vpop.trf.xlu0
    %v587 = vpop.trf.xlu0
    %v588 = vpop.trf.xlu0
    %v589 = vpop.trf.xlu0
    %v590 = vpop.trf.xlu0
    %v591 = vpop.trf.xlu0
    %v592 = vpop.trf.xlu0
    %v593 = vpop.trf.xlu0
    %v594 = vpop.trf.xlu0
    %v595 = vpop.trf.xlu0
    %v596 = vpop.trf.xlu0
    %v597 = vpop.trf.xlu0
    %v598 = vpop.trf.xlu0
    %v599 = vpop.trf.xlu0
    %vm600 = vcmask 64512
    %601 = vst.msk [vmem:[%s1] sm:$0xff] %vm600, %v360
    %602 = vst.msk [vmem:[%s1 + $0x8] sm:$0xff] %vm600, %v361
    %603 = vst.msk [vmem:[%s1 + $0x10] sm:$0xff] %vm600, %v392
    %604 = vst.msk [vmem:[%s1 + $0x18] sm:$0xff] %vm600, %v393
    %605 = vst.msk [vmem:[%s1 + $0x20] sm:$0xff] %vm600, %v424
    %606 = vst.msk [vmem:[%s1 + $0x28] sm:$0xff] %vm600, %v425
    %607 = vst.msk [vmem:[%s1 + $0x30] sm:$0xff] %vm600, %v456
    %608 = vst.msk [vmem:[%s1 + $0x38] sm:$0xff] %vm600, %v457
    %609 = vst.msk [vmem:[%s1 + $0x80] sm:$0xff] %vm600, %v488
    %610 = vst.msk [vmem:[%s1 + $0x88] sm:$0xff] %vm600, %v489
    %611 = vst.msk [vmem:[%s1 + $0x90] sm:$0xff] %vm600, %v520
    %612 = vst.msk [vmem:[%s1 + $0x98] sm:$0xff] %vm600, %v521
    %613 = vst.msk [vmem:[%s1 + $0xa0] sm:$0xff] %vm600, %v552
    %614 = vst.msk [vmem:[%s1 + $0xa8] sm:$0xff] %vm600, %v553
    %615 = vst.msk [vmem:[%s1 + $0xb0] sm:$0xff] %vm600, %v584
    %616 = vst.msk [vmem:[%s1 + $0xb8] sm:$0xff] %vm600, %v585
    %617 = vxpose.xlu0.b32.start [1/16] %v329, 128
    %618 = vxpose.xlu0.b32.cont [2/16] 0.0, 128
    %619 = vxpose.xlu0.b32.cont [3/16] 0.0, 128
    %620 = vxpose.xlu0.b32.cont [4/16] 0.0, 128
    %621 = vxpose.xlu0.b32.cont [5/16] 0.0, 128
    %622 = vxpose.xlu0.b32.cont [6/16] 0.0, 128
    %623 = vxpose.xlu0.b32.cont [7/16] 0.0, 128
    %624 = vxpose.xlu0.b32.cont [8/16] 0.0, 128
    %625 = vxpose.xlu0.b32.cont [9/16] 0.0, 128
    %626 = vxpose.xlu0.b32.cont [10/16] 0.0, 128
    %627 = vxpose.xlu0.b32.cont [11/16] 0.0, 128
    %628 = vxpose.xlu0.b32.cont [12/16] 0.0, 128
    %629 = vxpose.xlu0.b32.cont [13/16] 0.0, 128
    %630 = vxpose.xlu0.b32.cont [14/16] 0.0, 128
    %631 = vxpose.xlu0.b32.cont [15/16] 0.0, 128
    %632 = vxpose.xlu0.b32.end [16/16] 0.0, 128
    %v633 = vpop.trf.xlu0
    %v634 = vpop.trf.xlu0
    %v635 = vpop.trf.xlu0
    %v636 = vpop.trf.xlu0
    %v637 = vpop.trf.xlu0
    %v638 = vpop.trf.xlu0
    %v639 = vpop.trf.xlu0
    %v640 = vpop.trf.xlu0
    %v641 = vpop.trf.xlu0
    %v642 = vpop.trf.xlu0
    %v643 = vpop.trf.xlu0
    %v644 = vpop.trf.xlu0
    %v645 = vpop.trf.xlu0
    %v646 = vpop.trf.xlu0
    %v647 = vpop.trf.xlu0
    %v648 = vpop.trf.xlu0
    %649 = vxpose.xlu0.b32.start [1/16] %v331, 128
    %650 = vxpose.xlu0.b32.cont [2/16] 0.0, 128
    %651 = vxpose.xlu0.b32.cont [3/16] 0.0, 128
    %652 = vxpose.xlu0.b32.cont [4/16] 0.0, 128
    %653 = vxpose.xlu0.b32.cont [5/16] 0.0, 128
    %654 = vxpose.xlu0.b32.cont [6/16] 0.0, 128
    %655 = vxpose.xlu0.b32.cont [7/16] 0.0, 128
    %656 = vxpose.xlu0.b32.cont [8/16] 0.0, 128
    %657 = vxpose.xlu0.b32.cont [9/16] 0.0, 128
    %658 = vxpose.xlu0.b32.cont [10/16] 0.0, 128
    %659 = vxpose.xlu0.b32.cont [11/16] 0.0, 128
    %660 = vxpose.xlu0.b32.cont [12/16] 0.0, 128
    %661 = vxpose.xlu0.b32.cont [13/16] 0.0, 128
    %662 = vxpose.xlu0.b32.cont [14/16] 0.0, 128
    %663 = vxpose.xlu0.b32.cont [15/16] 0.0, 128
    %664 = vxpose.xlu0.b32.end [16/16] 0.0, 128
    %v665 = vpop.trf.xlu0
    %v666 = vpop.trf.xlu0
    %v667 = vpop.trf.xlu0
    %v668 = vpop.trf.xlu0
    %v669 = vpop.trf.xlu0
    %v670 = vpop.trf.xlu0
    %v671 = vpop.trf.xlu0
    %v672 = vpop.trf.xlu0
    %v673 = vpop.trf.xlu0
    %v674 = vpop.trf.xlu0
    %v675 = vpop.trf.xlu0
    %v676 = vpop.trf.xlu0
    %v677 = vpop.trf.xlu0
    %v678 = vpop.trf.xlu0
    %v679 = vpop.trf.xlu0
    %v680 = vpop.trf.xlu0
    %681 = vxpose.xlu0.b32.start [1/16] %v333, 128
    %682 = vxpose.xlu0.b32.cont [2/16] 0.0, 128
    %683 = vxpose.xlu0.b32.cont [3/16] 0.0, 128
    %684 = vxpose.xlu0.b32.cont [4/16] 0.0, 128
    %685 = vxpose.xlu0.b32.cont [5/16] 0.0, 128
    %686 = vxpose.xlu0.b32.cont [6/16] 0.0, 128
    %687 = vxpose.xlu0.b32.cont [7/16] 0.0, 128
    %688 = vxpose.xlu0.b32.cont [8/16] 0.0, 128
    %689 = vxpose.xlu0.b32.cont [9/16] 0.0, 128
    %690 = vxpose.xlu0.b32.cont [10/16] 0.0, 128
    %691 = vxpose.xlu0.b32.cont [11/16] 0.0, 128
    %692 = vxpose.xlu0.b32.cont [12/16] 0.0, 128
    %693 = vxpose.xlu0.b32.cont [13/16] 0.0, 128
    %694 = vxpose.xlu0.b32.cont [14/16] 0.0, 128
    %695 = vxpose.xlu0.b32.cont [15/16] 0.0, 128
    %696 = vxpose.xlu0.b32.end [16/16] 0.0, 128
    %v697 = vpop.trf.xlu0
    %v698 = vpop.trf.xlu0
    %v699 = vpop.trf.xlu0
    %v700 = vpop.trf.xlu0
    %v701 = vpop.trf.xlu0
    %v702 = vpop.trf.xlu0
    %v703 = vpop.trf.xlu0
    %v704 = vpop.trf.xlu0
    %v705 = vpop.trf.xlu0
    %v706 = vpop.trf.xlu0
    %v707 = vpop.trf.xlu0
    %v708 = vpop.trf.xlu0
    %v709 = vpop.trf.xlu0
    %v710 = vpop.trf.xlu0
    %v711 = vpop.trf.xlu0
    %v712 = vpop.trf.xlu0
    %713 = vxpose.xlu0.b32.start [1/16] %v335, 128
    %714 = vxpose.xlu0.b32.cont [2/16] 0.0, 128
    %715 = vxpose.xlu0.b32.cont [3/16] 0.0, 128
    %716 = vxpose.xlu0.b32.cont [4/16] 0.0, 128
    %717 = vxpose.xlu0.b32.cont [5/16] 0.0, 128
    %718 = vxpose.xlu0.b32.cont [6/16] 0.0, 128
    %719 = vxpose.xlu0.b32.cont [7/16] 0.0, 128
    %720 = vxpose.xlu0.b32.cont [8/16] 0.0, 128
    %721 = vxpose.xlu0.b32.cont [9/16] 0.0, 128
    %722 = vxpose.xlu0.b32.cont [10/16] 0.0, 128
    %723 = vxpose.xlu0.b32.cont [11/16] 0.0, 128
    %724 = vxpose.xlu0.b32.cont [12/16] 0.0, 128
    %725 = vxpose.xlu0.b32.cont [13/16] 0.0, 128
    %726 = vxpose.xlu0.b32.cont [14/16] 0.0, 128
    %727 = vxpose.xlu0.b32.cont [15/16] 0.0, 128
    %728 = vxpose.xlu0.b32.end [16/16] 0.0, 128
    %v729 = vpop.trf.xlu0
    %v730 = vpop.trf.xlu0
    %v731 = vpop.trf.xlu0
    %v732 = vpop.trf.xlu0
    %v733 = vpop.trf.xlu0
    %v734 = vpop.trf.xlu0
    %v735 = vpop.trf.xlu0
    %v736 = vpop.trf.xlu0
    %v737 = vpop.trf.xlu0
    %v738 = vpop.trf.xlu0
    %v739 = vpop.trf.xlu0
    %v740 = vpop.trf.xlu0
    %v741 = vpop.trf.xlu0
    %v742 = vpop.trf.xlu0
    %v743 = vpop.trf.xlu0
    %v744 = vpop.trf.xlu0
    %745 = vxpose.xlu0.b32.start [1/16] %v337, 128
    %746 = vxpose.xlu0.b32.cont [2/16] 0.0, 128
    %747 = vxpose.xlu0.b32.cont [3/16] 0.0, 128
    %748 = vxpose.xlu0.b32.cont [4/16] 0.0, 128
    %749 = vxpose.xlu0.b32.cont [5/16] 0.0, 128
    %750 = vxpose.xlu0.b32.cont [6/16] 0.0, 128
    %751 = vxpose.xlu0.b32.cont [7/16] 0.0, 128
    %752 = vxpose.xlu0.b32.cont [8/16] 0.0, 128
    %753 = vxpose.xlu0.b32.cont [9/16] 0.0, 128
    %754 = vxpose.xlu0.b32.cont [10/16] 0.0, 128
    %755 = vxpose.xlu0.b32.cont [11/16] 0.0, 128
    %756 = vxpose.xlu0.b32.cont [12/16] 0.0, 128
    %757 = vxpose.xlu0.b32.cont [13/16] 0.0, 128
    %758 = vxpose.xlu0.b32.cont [14/16] 0.0, 128
    %759 = vxpose.xlu0.b32.cont [15/16] 0.0, 128
    %760 = vxpose.xlu0.b32.end [16/16] 0.0, 128
    %v761 = vpop.trf.xlu0
    %v762 = vpop.trf.xlu0
    %v763 = vpop.trf.xlu0
    %v764 = vpop.trf.xlu0
    %v765 = vpop.trf.xlu0
    %v766 = vpop.trf.xlu0
    %v767 = vpop.trf.xlu0
    %v768 = vpop.trf.xlu0
    %v769 = vpop.trf.xlu0
    %v770 = vpop.trf.xlu0
    %v771 = vpop.trf.xlu0
    %v772 = vpop.trf.xlu0
    %v773 = vpop.trf.xlu0
    %v774 = vpop.trf.xlu0
    %v775 = vpop.trf.xlu0
    %v776 = vpop.trf.xlu0
    %777 = vxpose.xlu0.b32.start [1/16] %v339, 128
    %778 = vxpose.xlu0.b32.cont [2/16] 0.0, 128
    %779 = vxpose.xlu0.b32.cont [3/16] 0.0, 128
    %780 = vxpose.xlu0.b32.cont [4/16] 0.0, 128
    %781 = vxpose.xlu0.b32.cont [5/16] 0.0, 128
    %782 = vxpose.xlu0.b32.cont [6/16] 0.0, 128
    %783 = vxpose.xlu0.b32.cont [7/16] 0.0, 128
    %784 = vxpose.xlu0.b32.cont [8/16] 0.0, 128
    %785 = vxpose.xlu0.b32.cont [9/16] 0.0, 128
    %786 = vxpose.xlu0.b32.cont [10/16] 0.0, 128
    %787 = vxpose.xlu0.b32.cont [11/16] 0.0, 128
    %788 = vxpose.xlu0.b32.cont [12/16] 0.0, 128
    %789 = vxpose.xlu0.b32.cont [13/16] 0.0, 128
    %790 = vxpose.xlu0.b32.cont [14/16] 0.0, 128
    %791 = vxpose.xlu0.b32.cont [15/16] 0.0, 128
    %792 = vxpose.xlu0.b32.end [16/16] 0.0, 128
    %v793 = vpop.trf.xlu0
    %v794 = vpop.trf.xlu0
    %v795 = vpop.trf.xlu0
    %v796 = vpop.trf.xlu0
    %v797 = vpop.trf.xlu0
    %v798 = vpop.trf.xlu0
    %v799 = vpop.trf.xlu0
    %v800 = vpop.trf.xlu0
    %v801 = vpop.trf.xlu0
    %v802 = vpop.trf.xlu0
    %v803 = vpop.trf.xlu0
    %v804 = vpop.trf.xlu0
    %v805 = vpop.trf.xlu0
    %v806 = vpop.trf.xlu0
    %v807 = vpop.trf.xlu0
    %v808 = vpop.trf.xlu0
    %809 = vxpose.xlu0.b32.start [1/16] %v341, 128
    %810 = vxpose.xlu0.b32.cont [2/16] 0.0, 128
    %811 = vxpose.xlu0.b32.cont [3/16] 0.0, 128
    %812 = vxpose.xlu0.b32.cont [4/16] 0.0, 128
    %813 = vxpose.xlu0.b32.cont [5/16] 0.0, 128
    %814 = vxpose.xlu0.b32.cont [6/16] 0.0, 128
    %815 = vxpose.xlu0.b32.cont [7/16] 0.0, 128
    %816 = vxpose.xlu0.b32.cont [8/16] 0.0, 128
    %817 = vxpose.xlu0.b32.cont [9/16] 0.0, 128
    %818 = vxpose.xlu0.b32.cont [10/16] 0.0, 128
    %819 = vxpose.xlu0.b32.cont [11/16] 0.0, 128
    %820 = vxpose.xlu0.b32.cont [12/16] 0.0, 128
    %821 = vxpose.xlu0.b32.cont [13/16] 0.0, 128
    %822 = vxpose.xlu0.b32.cont [14/16] 0.0, 128
    %823 = vxpose.xlu0.b32.cont [15/16] 0.0, 128
    %824 = vxpose.xlu0.b32.end [16/16] 0.0, 128
    %v825 = vpop.trf.xlu0
    %v826 = vpop.trf.xlu0
    %v827 = vpop.trf.xlu0
    %v828 = vpop.trf.xlu0
    %v829 = vpop.trf.xlu0
    %v830 = vpop.trf.xlu0
    %v831 = vpop.trf.xlu0
    %v832 = vpop.trf.xlu0
    %v833 = vpop.trf.xlu0
    %v834 = vpop.trf.xlu0
    %v835 = vpop.trf.xlu0
    %v836 = vpop.trf.xlu0
    %v837 = vpop.trf.xlu0
    %v838 = vpop.trf.xlu0
    %v839 = vpop.trf.xlu0
    %v840 = vpop.trf.xlu0
    %841 = vxpose.xlu0.b32.start [1/16] %v343, 128
    %842 = vxpose.xlu0.b32.cont [2/16] 0.0, 128
    %843 = vxpose.xlu0.b32.cont [3/16] 0.0, 128
    %844 = vxpose.xlu0.b32.cont [4/16] 0.0, 128
    %845 = vxpose.xlu0.b32.cont [5/16] 0.0, 128
    %846 = vxpose.xlu0.b32.cont [6/16] 0.0, 128
    %847 = vxpose.xlu0.b32.cont [7/16] 0.0, 128
    %848 = vxpose.xlu0.b32.cont [8/16] 0.0, 128
    %849 = vxpose.xlu0.b32.cont [9/16] 0.0, 128
    %850 = vxpose.xlu0.b32.cont [10/16] 0.0, 128
    %851 = vxpose.xlu0.b32.cont [11/16] 0.0, 128
    %852 = vxpose.xlu0.b32.cont [12/16] 0.0, 128
    %853 = vxpose.xlu0.b32.cont [13/16] 0.0, 128
    %854 = vxpose.xlu0.b32.cont [14/16] 0.0, 128
    %855 = vxpose.xlu0.b32.cont [15/16] 0.0, 128
    %856 = vxpose.xlu0.b32.end [16/16] 0.0, 128
    %v857 = vpop.trf.xlu0
    %v858 = vpop.trf.xlu0
    %v859 = vpop.trf.xlu0
    %v860 = vpop.trf.xlu0
    %v861 = vpop.trf.xlu0
    %v862 = vpop.trf.xlu0
    %v863 = vpop.trf.xlu0
    %v864 = vpop.trf.xlu0
    %v865 = vpop.trf.xlu0
    %v866 = vpop.trf.xlu0
    %v867 = vpop.trf.xlu0
    %v868 = vpop.trf.xlu0
    %v869 = vpop.trf.xlu0
    %v870 = vpop.trf.xlu0
    %v871 = vpop.trf.xlu0
    %v872 = vpop.trf.xlu0
    %s873 = scalar_lea.vmem %s1, 64
    %874 = vst.msk [vmem:[%s873] sm:$0xff] %vm600, %v633
    %875 = vst.msk [vmem:[%s873 + $0x8] sm:$0xff] %vm600, %v634
    %876 = vst.msk [vmem:[%s873 + $0x10] sm:$0xff] %vm600, %v665
    %877 = vst.msk [vmem:[%s873 + $0x18] sm:$0xff] %vm600, %v666
    %878 = vst.msk [vmem:[%s873 + $0x20] sm:$0xff] %vm600, %v697
    %879 = vst.msk [vmem:[%s873 + $0x28] sm:$0xff] %vm600, %v698
    %880 = vst.msk [vmem:[%s873 + $0x30] sm:$0xff] %vm600, %v729
    %881 = vst.msk [vmem:[%s873 + $0x38] sm:$0xff] %vm600, %v730
    %882 = vst.msk [vmem:[%s873 + $0x80] sm:$0xff] %vm600, %v761
    %883 = vst.msk [vmem:[%s873 + $0x88] sm:$0xff] %vm600, %v762
    %884 = vst.msk [vmem:[%s873 + $0x90] sm:$0xff] %vm600, %v793
    %885 = vst.msk [vmem:[%s873 + $0x98] sm:$0xff] %vm600, %v794
    %886 = vst.msk [vmem:[%s873 + $0xa0] sm:$0xff] %vm600, %v825
    %887 = vst.msk [vmem:[%s873 + $0xa8] sm:$0xff] %vm600, %v826
    %888 = vst.msk [vmem:[%s873 + $0xb0] sm:$0xff] %vm600, %v857
    %889 = vst.msk [vmem:[%s873 + $0xb8] sm:$0xff] %vm600, %v858
    // Predicated region
    $region10: #{tpu_custom_call.1} parent=1 // pred_check
      _
    $region11: #{tpu_custom_call.1} parent=1 // pred_check_branch
      %891 = sbr.rel (0) target = $region13
    $region12: #{tpu_custom_call.1} parent=1 // pred_region
      _
    $region13: #{tpu_custom_call.1} parent=1 // pred_fallthru
      _
    // Predicated region
    $region14: #{tpu_custom_call.1} parent=1 // pred_check
      _
    $region15: #{tpu_custom_call.1} parent=1 // pred_check_branch
      %893 = sbr.rel (0) target = $region17
    $region16: #{tpu_custom_call.1} parent=1 // pred_region
      _
    $region17: #{tpu_custom_call.1} parent=1 // pred_fallthru
      _
    %894 = vsyncpa [#allocation4], 1

</llo_original>
